<compile_context>
chip_gen: v5e
topology: v5e:2x2
jax: 0.10.0
libtpu: 0.0.40
codegen_flags: <defaults>
</compile_context>

<pallas_src>
import functools
import math

import jax
import jax.numpy as jnp
from jax.experimental import pallas as pl
from jax.experimental.pallas import tpu as pltpu


def _transformer_block_kernel(q_ref, k_ref, v_ref, mask_ref,
                              wq_ref, wk_ref, wv_ref, wfc_ref,
                              w1_ref, w2_ref, b1_ref, vecs_ref, o_ref,
                              *, nb, lq, lk, lv, heads, scale, eps):
    # Shapes of the current block:
    #   q_ref : (nb*lq, E) f32        k_ref/v_ref : (nb*lk, E)/(nb*lv, E) bf16
    #   mask_ref : (lq, lk) int32 (shared across batch & heads)
    #   wq/wk/wv : (E, E) bf16 block-diagonal per-head weights, (in, out) layout
    #   wfc_ref  : (E, E) bf16 (in, out)   w1_ref : (E, ff) bf16   w2_ref : (ff, E) bf16
    #   b1_ref   : (1, ff) f32
    #   vecs_ref : (6, E) f32 = [b_fc, ln1_g, ln1_b, b_ff2, ln2_g, ln2_b]
    q_in = q_ref[...]                                   # f32, kept for residual
    qb = q_in.astype(jnp.bfloat16)
    kb = k_ref[...]                                     # already bf16
    vb = v_ref[...]

    # Lane-dense per-head projections (block-diag weight == per-head Linear).
    # The 1/sqrt(embed_size) softmax scale is folded into q here.
    qh = (jnp.dot(qb, wq_ref[...], preferred_element_type=jnp.float32)
          * scale).astype(jnp.bfloat16)
    kh = jnp.dot(kb, wk_ref[...],
                 preferred_element_type=jnp.float32).astype(jnp.bfloat16)
    vh = jnp.dot(vb, wv_ref[...],
                 preferred_element_type=jnp.float32).astype(jnp.bfloat16)

    E = q_in.shape[-1]
    hd = E // heads
    mask0 = mask_ref[...] == 0                          # hoisted: once per block
    neg = jnp.float32(-1e20) * scale                    # == masked_fill(-1e20)/sqrt(E)

    # Attention per batch element / per head (small static loops -> unrolled).
    per_batch = []
    for b in range(nb):
        q_b = qh[b * lq:(b + 1) * lq, :]
        k_b = kh[b * lk:(b + 1) * lk, :]
        v_b = vh[b * lv:(b + 1) * lv, :]
        heads_out = []
        for h in range(heads):
            sl = slice(h * hd, (h + 1) * hd)
            # energy[q, k] = <q_h[q], k_h[k]>  (contract last dims; no transpose)
            e = jax.lax.dot_general(q_b[:, sl], k_b[:, sl],
                                    (((1,), (1,)), ((), ())),
                                    preferred_element_type=jnp.float32)
            e = jnp.where(mask0, neg, e)
            m = jnp.max(e, axis=-1, keepdims=True)
            p = jnp.exp(e - m)
            attn = p * pl.reciprocal(jnp.sum(p, axis=-1, keepdims=True),
                                     approx=True)
            out_h = jnp.dot(attn.astype(jnp.bfloat16), v_b[:, sl],
                            preferred_element_type=jnp.float32)     # (lq, hd)
            heads_out.append(out_h.astype(jnp.bfloat16))
        per_batch.append(heads_out[0] if heads == 1
                         else jnp.concatenate(heads_out, axis=-1))   # (lq, E)
    concat = per_batch[0] if nb == 1 else jnp.concatenate(per_batch, axis=0)

    vecs = vecs_ref[...]
    b_fc, g1, be1 = vecs[0:1, :], vecs[1:2, :], vecs[2:3, :]
    b2, g2, be2 = vecs[3:4, :], vecs[4:5, :], vecs[5:6, :]

    # Single K=E fc_out matmul over the whole row block (head concat fused above).
    attn_out = jnp.dot(concat, wfc_ref[...],
                       preferred_element_type=jnp.float32) + b_fc

    # residual + LayerNorm1 (dropout = eval-mode identity)
    x = attn_out + q_in
    mu = jnp.mean(x, axis=-1, keepdims=True)
    xc = x - mu
    var = jnp.mean(xc * xc, axis=-1, keepdims=True)
    x1 = xc * jax.lax.rsqrt(var + eps) * g1 + be1

    # FFN (Linear -> ReLU -> Linear) + residual + LayerNorm2
    h1 = jnp.dot(x1.astype(jnp.bfloat16), w1_ref[...],
                 preferred_element_type=jnp.float32) + b1_ref[...]
    h1 = jnp.maximum(h1, 0.0)
    f = jnp.dot(h1.astype(jnp.bfloat16), w2_ref[...],
                preferred_element_type=jnp.float32) + b2
    y = f + x1
    mu2 = jnp.mean(y, axis=-1, keepdims=True)
    yc = y - mu2
    var2 = jnp.mean(yc * yc, axis=-1, keepdims=True)
    o_ref[...] = (yc * jax.lax.rsqrt(var2 + eps) * g2 + be2).astype(o_ref.dtype)


def init_params(key, embed_size, heads, forward_expansion):
    hd = embed_size // heads
    ff = forward_expansion * embed_size
    ks = jax.random.split(key, 9)
    bh = 1.0 / math.sqrt(hd)
    be = 1.0 / math.sqrt(embed_size)
    bf = 1.0 / math.sqrt(ff)
    return {
        # PyTorch nn.Linear layout: weight is (out, in)
        "wq": jax.random.uniform(ks[0], (hd, hd), jnp.float32, -bh, bh),
        "wk": jax.random.uniform(ks[1], (hd, hd), jnp.float32, -bh, bh),
        "wv": jax.random.uniform(ks[2], (hd, hd), jnp.float32, -bh, bh),
        "w_fc": jax.random.uniform(ks[3], (embed_size, embed_size), jnp.float32, -be, be),
        "b_fc": jax.random.uniform(ks[4], (embed_size,), jnp.float32, -be, be),
        "ln1_g": jnp.ones((embed_size,), jnp.float32),
        "ln1_b": jnp.zeros((embed_size,), jnp.float32),
        "w_ff1": jax.random.uniform(ks[5], (ff, embed_size), jnp.float32, -be, be),
        "b_ff1": jax.random.uniform(ks[6], (ff,), jnp.float32, -be, be),
        "w_ff2": jax.random.uniform(ks[7], (embed_size, ff), jnp.float32, -bf, bf),
        "b_ff2": jax.random.uniform(ks[8], (embed_size,), jnp.float32, -bf, bf),
        "ln2_g": jnp.ones((embed_size,), jnp.float32),
        "ln2_b": jnp.zeros((embed_size,), jnp.float32),
    }


def transformer_block(value, key, query, mask, params, embed_size, heads):
    N, Lq, E = query.shape
    Lk = key.shape[1]
    Lv = value.shape[1]
    assert Lk == Lv, "key and value lengths must match"
    hd = E // heads
    assert hd * heads == E
    ff = params["w_ff1"].shape[0]
    eps = 1e-5
    scale = 1.0 / math.sqrt(embed_size)

    # --- choose how many batch elements go into one grid step (~256 rows) ---
    nb = max(1, min(N, max(1, 256 // max(Lq, 1))))
    while N % nb:
        nb -= 1
    if (nb * Lq) % 8 and nb != N:       # keep row blocks sublane-aligned
        nb = N
    grid = (N // nb,)

    # --- one-time layout plumbing in the wrapper (no in-kernel transposes) ---
    eye = jnp.eye(heads, dtype=jnp.float32)
    # per-head (hd, hd) weight -> block-diagonal (E, E) in (in, out) layout
    wq_bd = jnp.kron(eye, params["wq"].T).astype(jnp.bfloat16)
    wk_bd = jnp.kron(eye, params["wk"].T).astype(jnp.bfloat16)
    wv_bd = jnp.kron(eye, params["wv"].T).astype(jnp.bfloat16)
    wfc_t = params["w_fc"].T.astype(jnp.bfloat16)          # (E, E) (in, out)
    w1_t = params["w_ff1"].T.astype(jnp.bfloat16)          # (E, ff)
    w2_t = params["w_ff2"].T.astype(jnp.bfloat16)          # (ff, E)

    # mask shared across batch and heads -> pass it once as (Lq, Lk) int32
    mq, mk = mask.shape[-2], mask.shape[-1]
    assert mask.size == mq * mk, "mask must be shared across batch and heads"
    mask2d = mask.reshape(mq, mk).astype(jnp.int32)

    # flatten batch into the row dimension; pre-cast k/v to bf16
    q2 = query.reshape(N * Lq, E)
    k2 = key.reshape(N * Lk, E).astype(jnp.bfloat16)
    v2 = value.reshape(N * Lv, E).astype(jnp.bfloat16)

    # pack the six E-wide vectors into one (6, E) block
    vecs = jnp.stack([params["b_fc"], params["ln1_g"], params["ln1_b"],
                      params["b_ff2"], params["ln2_g"], params["ln2_b"]], axis=0)

    out = pl.pallas_call(
        functools.partial(_transformer_block_kernel, nb=nb, lq=Lq, lk=Lk, lv=Lv,
                          heads=heads, scale=scale, eps=eps),
        out_shape=jax.ShapeDtypeStruct((N * Lq, E), jnp.float32),
        grid=grid,
        in_specs=[
            pl.BlockSpec((nb * Lq, E), lambda n: (n, 0)),   # query rows (f32)
            pl.BlockSpec((nb * Lk, E), lambda n: (n, 0)),   # key rows (bf16)
            pl.BlockSpec((nb * Lv, E), lambda n: (n, 0)),   # value rows (bf16)
            pl.BlockSpec((mq, mk), lambda n: (0, 0)),       # shared mask
            pl.BlockSpec((E, E), lambda n: (0, 0)),         # wq block-diag
            pl.BlockSpec((E, E), lambda n: (0, 0)),         # wk block-diag
            pl.BlockSpec((E, E), lambda n: (0, 0)),         # wv block-diag
            pl.BlockSpec((E, E), lambda n: (0, 0)),         # w_fc^T
            pl.BlockSpec((E, ff), lambda n: (0, 0)),        # w_ff1^T
            pl.BlockSpec((ff, E), lambda n: (0, 0)),        # w_ff2^T
            pl.BlockSpec((1, ff), lambda n: (0, 0)),        # b_ff1
            pl.BlockSpec((6, E), lambda n: (0, 0)),         # packed E-wide vecs
        ],
        out_specs=pl.BlockSpec((nb * Lq, E), lambda n: (n, 0)),
        compiler_params=pltpu.CompilerParams(dimension_semantics=("parallel",)),
    )(q2, k2, v2, mask2d, wq_bd, wk_bd, wv_bd, wfc_t, w1_t, w2_t,
      params["b_ff1"].reshape(1, ff), vecs)

    return out.reshape(N, Lq, E)


def transformer_block_ref(value, key, query, mask, params, embed_size, heads):
    """Pure-JAX f32 reference mirroring the PyTorch forward (eval mode)."""
    N, Lv, E = value.shape
    Lk, Lq = key.shape[1], query.shape[1]
    hd = E // heads
    v = value.reshape(N, Lv, heads, hd) @ params["wv"].T
    k = key.reshape(N, Lk, heads, hd) @ params["wk"].T
    q = query.reshape(N, Lq, heads, hd) @ params["wq"].T
    energy = jnp.einsum("nqhd,nkhd->nhqk", q, k)
    energy = jnp.where(jnp.broadcast_to(mask, energy.shape) == 0, -1e20, energy)
    attn = jax.nn.softmax(energy / math.sqrt(embed_size), axis=3)
    attn_out = jnp.einsum("nhql,nlhd->nqhd", attn, v).reshape(N, Lq, E)
    attn_out = attn_out @ params["w_fc"].T + params["b_fc"]

    def layer_norm(x, g, b, eps=1e-5):
        mu = jnp.mean(x, axis=-1, keepdims=True)
        var = jnp.mean((x - mu) ** 2, axis=-1, keepdims=True)
        return (x - mu) / jnp.sqrt(var + eps) * g + b

    x = layer_norm(attn_out + query, params["ln1_g"], params["ln1_b"])
    h = jnp.maximum(x @ params["w_ff1"].T + params["b_ff1"], 0.0)
    f = h @ params["w_ff2"].T + params["b_ff2"]
    return layer_norm(f + x, params["ln2_g"], params["ln2_b"])


if __name__ == "__main__":
    embed_size, heads, forward_expansion = 32, 2, 4
    N, L = 2, 8

    key0 = jax.random.PRNGKey(0)
    kp, kv, kk, kq = jax.random.split(key0, 4)
    params = init_params(kp, embed_size, heads, forward_expansion)

    value = jax.random.normal(kv, (N, L, embed_size), jnp.float32)
    key_in = jax.random.normal(kk, (N, L, embed_size), jnp.float32)
    query = jax.random.normal(kq, (N, L, embed_size), jnp.float32)
    # Causal mask, broadcastable to (N, heads, Lq, Lk) like the PyTorch usage.
    mask = jnp.tril(jnp.ones((L, L), jnp.int32))[None, None, :, :]

    out = transformer_block(value, key_in, query, mask, params, embed_size, heads)
    out = jax.block_until_ready(out)

    ref = transformer_block_ref(value, key_in, query, mask, params,
                                embed_size, heads)
    assert out.shape == (N, L, embed_size)
    # bf16 MXU operands (f32 accumulation/softmax/LayerNorm) -> loose tolerance.
    assert jnp.allclose(out, ref, atol=1e-1, rtol=1e-1), "mismatch vs reference"

    print("KERNEL_OK")
</pallas_src>

<mosaic_0001>
module attributes {stable_mosaic.version = 11 : i64} {
  func.func @_transformer_block_kernel(%arg0: i32, %arg1: memref<16x32xf32, #tpu.memory_space<vmem>>, %arg2: memref<16x32xbf16, #tpu.memory_space<vmem>>, %arg3: memref<16x32xbf16, #tpu.memory_space<vmem>>, %arg4: memref<8x8xi32, #tpu.memory_space<vmem>>, %arg5: memref<32x32xbf16, #tpu.memory_space<vmem>>, %arg6: memref<32x32xbf16, #tpu.memory_space<vmem>>, %arg7: memref<32x32xbf16, #tpu.memory_space<vmem>>, %arg8: memref<32x32xbf16, #tpu.memory_space<vmem>>, %arg9: memref<32x128xbf16, #tpu.memory_space<vmem>>, %arg10: memref<128x32xbf16, #tpu.memory_space<vmem>>, %arg11: memref<1x128xf32, #tpu.memory_space<vmem>>, %arg12: memref<6x32xf32, #tpu.memory_space<vmem>>, %arg13: memref<16x32xf32, #tpu.memory_space<vmem>>) attributes {dimension_semantics = [#tpu.dimension_semantics<parallel>], iteration_bounds = array<i64: 1>, scalar_prefetch = 0 : i64, scratch_operands = 0 : i64, tpu.core_type = #tpu.core_type<tc>, window_params = [{transform_indices = @transform_0, window_bounds = array<i64: 16, 32>}, {transform_indices = @transform_1, window_bounds = array<i64: 16, 32>}, {transform_indices = @transform_2, window_bounds = array<i64: 16, 32>}, {pipeline_mode = #tpu.pipeline_mode<synchronous>, transform_indices = @transform_3, window_bounds = array<i64: 8, 8>}, {pipeline_mode = #tpu.pipeline_mode<synchronous>, transform_indices = @transform_4, window_bounds = array<i64: 32, 32>}, {pipeline_mode = #tpu.pipeline_mode<synchronous>, transform_indices = @transform_5, window_bounds = array<i64: 32, 32>}, {pipeline_mode = #tpu.pipeline_mode<synchronous>, transform_indices = @transform_6, window_bounds = array<i64: 32, 32>}, {pipeline_mode = #tpu.pipeline_mode<synchronous>, transform_indices = @transform_7, window_bounds = array<i64: 32, 32>}, {pipeline_mode = #tpu.pipeline_mode<synchronous>, transform_indices = @transform_8, window_bounds = array<i64: 32, 128>}, {pipeline_mode = #tpu.pipeline_mode<synchronous>, transform_indices = @transform_9, window_bounds = array<i64: 128, 32>}, {pipeline_mode = #tpu.pipeline_mode<synchronous>, transform_indices = @transform_10, window_bounds = array<i64: 1, 128>}, {pipeline_mode = #tpu.pipeline_mode<synchronous>, transform_indices = @transform_11, window_bounds = array<i64: 6, 32>}, {transform_indices = @transform_12, window_bounds = array<i64: 16, 32>}]} {
    %c0 = arith.constant 0 : index
    %c0_0 = arith.constant 0 : index
    %0 = vector.load %arg1[%c0, %c0_0] : memref<16x32xf32, #tpu.memory_space<vmem>>, vector<16x32xf32>
    %1 = arith.truncf %0 : vector<16x32xf32> to vector<16x32xbf16>
    %c0_1 = arith.constant 0 : index
    %c0_2 = arith.constant 0 : index
    %2 = vector.load %arg2[%c0_1, %c0_2] : memref<16x32xbf16, #tpu.memory_space<vmem>>, vector<16x32xbf16>
    %c0_3 = arith.constant 0 : index
    %c0_4 = arith.constant 0 : index
    %3 = vector.load %arg3[%c0_3, %c0_4] : memref<16x32xbf16, #tpu.memory_space<vmem>>, vector<16x32xbf16>
    %c0_5 = arith.constant 0 : index
    %c0_6 = arith.constant 0 : index
    %4 = vector.load %arg5[%c0_5, %c0_6] : memref<32x32xbf16, #tpu.memory_space<vmem>>, vector<32x32xbf16>
    %cst = arith.constant dense<0.000000e+00> : vector<16x32xf32>
    %5 = tpu.matmul %1, %4, %cst {dimension_numbers = #tpu.dot_dimension_numbers<[1], [0], [0], [1], [0, 0, 1, 1], [], []>} : vector<16x32xbf16>, vector<32x32xbf16>, vector<16x32xf32> -> vector<16x32xf32>
    %cst_7 = arith.constant 0.176776692 : f32
    %6 = vector.broadcast %cst_7 : f32 to vector<16x32xf32>
    %7 = arith.mulf %5, %6 : vector<16x32xf32>
    %8 = arith.truncf %7 : vector<16x32xf32> to vector<16x32xbf16>
    %c0_8 = arith.constant 0 : index
    %c0_9 = arith.constant 0 : index
    %9 = vector.load %arg6[%c0_8, %c0_9] : memref<32x32xbf16, #tpu.memory_space<vmem>>, vector<32x32xbf16>
    %cst_10 = arith.constant dense<0.000000e+00> : vector<16x32xf32>
    %10 = tpu.matmul %2, %9, %cst_10 {dimension_numbers = #tpu.dot_dimension_numbers<[1], [0], [0], [1], [0, 0, 1, 1], [], []>} : vector<16x32xbf16>, vector<32x32xbf16>, vector<16x32xf32> -> vector<16x32xf32>
    %11 = arith.truncf %10 : vector<16x32xf32> to vector<16x32xbf16>
    %c0_11 = arith.constant 0 : index
    %c0_12 = arith.constant 0 : index
    %12 = vector.load %arg7[%c0_11, %c0_12] : memref<32x32xbf16, #tpu.memory_space<vmem>>, vector<32x32xbf16>
    %cst_13 = arith.constant dense<0.000000e+00> : vector<16x32xf32>
    %13 = tpu.matmul %3, %12, %cst_13 {dimension_numbers = #tpu.dot_dimension_numbers<[1], [0], [0], [1], [0, 0, 1, 1], [], []>} : vector<16x32xbf16>, vector<32x32xbf16>, vector<16x32xf32> -> vector<16x32xf32>
    %14 = arith.truncf %13 : vector<16x32xf32> to vector<16x32xbf16>
    %c0_14 = arith.constant 0 : index
    %c0_15 = arith.constant 0 : index
    %15 = vector.load %arg4[%c0_14, %c0_15] : memref<8x8xi32, #tpu.memory_space<vmem>>, vector<8x8xi32>
    %c0_i32 = arith.constant 0 : i32
    %16 = vector.broadcast %c0_i32 : i32 to vector<8x8xi32>
    %17 = arith.cmpi eq, %15, %16 : vector<8x8xi32>
    %cst_16 = arith.constant -1.000000e+20 : f32
    %cst_17 = arith.constant 0.176776692 : f32
    %18 = arith.mulf %cst_16, %cst_17 : f32
    %19 = vector.extract_strided_slice %8 {offsets = [0, 0], sizes = [8, 32], strides = [1, 1]} : vector<16x32xbf16> to vector<8x32xbf16>
    %20 = vector.extract_strided_slice %11 {offsets = [0, 0], sizes = [8, 32], strides = [1, 1]} : vector<16x32xbf16> to vector<8x32xbf16>
    %21 = vector.extract_strided_slice %14 {offsets = [0, 0], sizes = [8, 32], strides = [1, 1]} : vector<16x32xbf16> to vector<8x32xbf16>
    %22 = vector.extract_strided_slice %19 {offsets = [0, 0], sizes = [8, 16], strides = [1, 1]} : vector<8x32xbf16> to vector<8x16xbf16>
    %23 = vector.extract_strided_slice %20 {offsets = [0, 0], sizes = [8, 16], strides = [1, 1]} : vector<8x32xbf16> to vector<8x16xbf16>
    %cst_18 = arith.constant dense<0.000000e+00> : vector<8x8xf32>
    %24 = tpu.matmul %22, %23, %cst_18 {dimension_numbers = #tpu.dot_dimension_numbers<[1], [1], [0], [0], [0, 0, 1, 0], [], []>} : vector<8x16xbf16>, vector<8x16xbf16>, vector<8x8xf32> -> vector<8x8xf32>
    %25 = vector.broadcast %18 : f32 to vector<8x8xf32>
    %26 = arith.select %17, %25, %24 : vector<8x8xi1>, vector<8x8xf32>
    %cst_19 = arith.constant dense<0xFF800000> : vector<8xf32>
    %27 = vector.multi_reduction <maximumf>, %26, %cst_19 [1] : vector<8x8xf32> to vector<8xf32>
    %28 = vector.shape_cast %27 : vector<8xf32> to vector<8x1xf32>
    %29 = vector.broadcast %28 : vector<8x1xf32> to vector<8x8xf32>
    %30 = arith.subf %26, %29 : vector<8x8xf32>
    %31 = math.exp %30 : vector<8x8xf32>
    %cst_20 = arith.constant dense<0.000000e+00> : vector<8xf32>
    %32 = vector.multi_reduction <add>, %31, %cst_20 [1] : vector<8x8xf32> to vector<8xf32>
    %33 = vector.shape_cast %32 : vector<8xf32> to vector<8x1xf32>
    %34 = tpu.reciprocal %33 {approx = true} : vector<8x1xf32> -> vector<8x1xf32>
    %35 = vector.broadcast %34 : vector<8x1xf32> to vector<8x8xf32>
    %36 = arith.mulf %31, %35 : vector<8x8xf32>
    %37 = arith.truncf %36 : vector<8x8xf32> to vector<8x8xbf16>
    %38 = vector.extract_strided_slice %21 {offsets = [0, 0], sizes = [8, 16], strides = [1, 1]} : vector<8x32xbf16> to vector<8x16xbf16>
    %cst_21 = arith.constant dense<0.000000e+00> : vector<8x16xf32>
    %39 = tpu.matmul %37, %38, %cst_21 {dimension_numbers = #tpu.dot_dimension_numbers<[1], [0], [0], [1], [0, 0, 1, 1], [], []>} : vector<8x8xbf16>, vector<8x16xbf16>, vector<8x16xf32> -> vector<8x16xf32>
    %40 = arith.truncf %39 : vector<8x16xf32> to vector<8x16xbf16>
    %41 = vector.extract_strided_slice %19 {offsets = [0, 16], sizes = [8, 16], strides = [1, 1]} : vector<8x32xbf16> to vector<8x16xbf16>
    %42 = vector.extract_strided_slice %20 {offsets = [0, 16], sizes = [8, 16], strides = [1, 1]} : vector<8x32xbf16> to vector<8x16xbf16>
    %cst_22 = arith.constant dense<0.000000e+00> : vector<8x8xf32>
    %43 = tpu.matmul %41, %42, %cst_22 {dimension_numbers = #tpu.dot_dimension_numbers<[1], [1], [0], [0], [0, 0, 1, 0], [], []>} : vector<8x16xbf16>, vector<8x16xbf16>, vector<8x8xf32> -> vector<8x8xf32>
    %44 = vector.broadcast %18 : f32 to vector<8x8xf32>
    %45 = arith.select %17, %44, %43 : vector<8x8xi1>, vector<8x8xf32>
    %cst_23 = arith.constant dense<0xFF800000> : vector<8xf32>
    %46 = vector.multi_reduction <maximumf>, %45, %cst_23 [1] : vector<8x8xf32> to vector<8xf32>
    %47 = vector.shape_cast %46 : vector<8xf32> to vector<8x1xf32>
    %48 = vector.broadcast %47 : vector<8x1xf32> to vector<8x8xf32>
    %49 = arith.subf %45, %48 : vector<8x8xf32>
    %50 = math.exp %49 : vector<8x8xf32>
    %cst_24 = arith.constant dense<0.000000e+00> : vector<8xf32>
    %51 = vector.multi_reduction <add>, %50, %cst_24 [1] : vector<8x8xf32> to vector<8xf32>
    %52 = vector.shape_cast %51 : vector<8xf32> to vector<8x1xf32>
    %53 = tpu.reciprocal %52 {approx = true} : vector<8x1xf32> -> vector<8x1xf32>
    %54 = vector.broadcast %53 : vector<8x1xf32> to vector<8x8xf32>
    %55 = arith.mulf %50, %54 : vector<8x8xf32>
    %56 = arith.truncf %55 : vector<8x8xf32> to vector<8x8xbf16>
    %57 = vector.extract_strided_slice %21 {offsets = [0, 16], sizes = [8, 16], strides = [1, 1]} : vector<8x32xbf16> to vector<8x16xbf16>
    %cst_25 = arith.constant dense<0.000000e+00> : vector<8x16xf32>
    %58 = tpu.matmul %56, %57, %cst_25 {dimension_numbers = #tpu.dot_dimension_numbers<[1], [0], [0], [1], [0, 0, 1, 1], [], []>} : vector<8x8xbf16>, vector<8x16xbf16>, vector<8x16xf32> -> vector<8x16xf32>
    %59 = arith.truncf %58 : vector<8x16xf32> to vector<8x16xbf16>
    %60 = tpu.concatenate %40, %59 in 1 : vector<8x16xbf16>, vector<8x16xbf16> -> vector<8x32xbf16>
    %61 = vector.extract_strided_slice %8 {offsets = [8, 0], sizes = [8, 32], strides = [1, 1]} : vector<16x32xbf16> to vector<8x32xbf16>
    %62 = vector.extract_strided_slice %11 {offsets = [8, 0], sizes = [8, 32], strides = [1, 1]} : vector<16x32xbf16> to vector<8x32xbf16>
    %63 = vector.extract_strided_slice %14 {offsets = [8, 0], sizes = [8, 32], strides = [1, 1]} : vector<16x32xbf16> to vector<8x32xbf16>
    %64 = vector.extract_strided_slice %61 {offsets = [0, 0], sizes = [8, 16], strides = [1, 1]} : vector<8x32xbf16> to vector<8x16xbf16>
    %65 = vector.extract_strided_slice %62 {offsets = [0, 0], sizes = [8, 16], strides = [1, 1]} : vector<8x32xbf16> to vector<8x16xbf16>
    %cst_26 = arith.constant dense<0.000000e+00> : vector<8x8xf32>
    %66 = tpu.matmul %64, %65, %cst_26 {dimension_numbers = #tpu.dot_dimension_numbers<[1], [1], [0], [0], [0, 0, 1, 0], [], []>} : vector<8x16xbf16>, vector<8x16xbf16>, vector<8x8xf32> -> vector<8x8xf32>
    %67 = vector.broadcast %18 : f32 to vector<8x8xf32>
    %68 = arith.select %17, %67, %66 : vector<8x8xi1>, vector<8x8xf32>
    %cst_27 = arith.constant dense<0xFF800000> : vector<8xf32>
    %69 = vector.multi_reduction <maximumf>, %68, %cst_27 [1] : vector<8x8xf32> to vector<8xf32>
    %70 = vector.shape_cast %69 : vector<8xf32> to vector<8x1xf32>
    %71 = vector.broadcast %70 : vector<8x1xf32> to vector<8x8xf32>
    %72 = arith.subf %68, %71 : vector<8x8xf32>
    %73 = math.exp %72 : vector<8x8xf32>
    %cst_28 = arith.constant dense<0.000000e+00> : vector<8xf32>
    %74 = vector.multi_reduction <add>, %73, %cst_28 [1] : vector<8x8xf32> to vector<8xf32>
    %75 = vector.shape_cast %74 : vector<8xf32> to vector<8x1xf32>
    %76 = tpu.reciprocal %75 {approx = true} : vector<8x1xf32> -> vector<8x1xf32>
    %77 = vector.broadcast %76 : vector<8x1xf32> to vector<8x8xf32>
    %78 = arith.mulf %73, %77 : vector<8x8xf32>
    %79 = arith.truncf %78 : vector<8x8xf32> to vector<8x8xbf16>
    %80 = vector.extract_strided_slice %63 {offsets = [0, 0], sizes = [8, 16], strides = [1, 1]} : vector<8x32xbf16> to vector<8x16xbf16>
    %cst_29 = arith.constant dense<0.000000e+00> : vector<8x16xf32>
    %81 = tpu.matmul %79, %80, %cst_29 {dimension_numbers = #tpu.dot_dimension_numbers<[1], [0], [0], [1], [0, 0, 1, 1], [], []>} : vector<8x8xbf16>, vector<8x16xbf16>, vector<8x16xf32> -> vector<8x16xf32>
    %82 = arith.truncf %81 : vector<8x16xf32> to vector<8x16xbf16>
    %83 = vector.extract_strided_slice %61 {offsets = [0, 16], sizes = [8, 16], strides = [1, 1]} : vector<8x32xbf16> to vector<8x16xbf16>
    %84 = vector.extract_strided_slice %62 {offsets = [0, 16], sizes = [8, 16], strides = [1, 1]} : vector<8x32xbf16> to vector<8x16xbf16>
    %cst_30 = arith.constant dense<0.000000e+00> : vector<8x8xf32>
    %85 = tpu.matmul %83, %84, %cst_30 {dimension_numbers = #tpu.dot_dimension_numbers<[1], [1], [0], [0], [0, 0, 1, 0], [], []>} : vector<8x16xbf16>, vector<8x16xbf16>, vector<8x8xf32> -> vector<8x8xf32>
    %86 = vector.broadcast %18 : f32 to vector<8x8xf32>
    %87 = arith.select %17, %86, %85 : vector<8x8xi1>, vector<8x8xf32>
    %cst_31 = arith.constant dense<0xFF800000> : vector<8xf32>
    %88 = vector.multi_reduction <maximumf>, %87, %cst_31 [1] : vector<8x8xf32> to vector<8xf32>
    %89 = vector.shape_cast %88 : vector<8xf32> to vector<8x1xf32>
    %90 = vector.broadcast %89 : vector<8x1xf32> to vector<8x8xf32>
    %91 = arith.subf %87, %90 : vector<8x8xf32>
    %92 = math.exp %91 : vector<8x8xf32>
    %cst_32 = arith.constant dense<0.000000e+00> : vector<8xf32>
    %93 = vector.multi_reduction <add>, %92, %cst_32 [1] : vector<8x8xf32> to vector<8xf32>
    %94 = vector.shape_cast %93 : vector<8xf32> to vector<8x1xf32>
    %95 = tpu.reciprocal %94 {approx = true} : vector<8x1xf32> -> vector<8x1xf32>
    %96 = vector.broadcast %95 : vector<8x1xf32> to vector<8x8xf32>
    %97 = arith.mulf %92, %96 : vector<8x8xf32>
    %98 = arith.truncf %97 : vector<8x8xf32> to vector<8x8xbf16>
    %99 = vector.extract_strided_slice %63 {offsets = [0, 16], sizes = [8, 16], strides = [1, 1]} : vector<8x32xbf16> to vector<8x16xbf16>
    %cst_33 = arith.constant dense<0.000000e+00> : vector<8x16xf32>
    %100 = tpu.matmul %98, %99, %cst_33 {dimension_numbers = #tpu.dot_dimension_numbers<[1], [0], [0], [1], [0, 0, 1, 1], [], []>} : vector<8x8xbf16>, vector<8x16xbf16>, vector<8x16xf32> -> vector<8x16xf32>
    %101 = arith.truncf %100 : vector<8x16xf32> to vector<8x16xbf16>
    %102 = tpu.concatenate %82, %101 in 1 : vector<8x16xbf16>, vector<8x16xbf16> -> vector<8x32xbf16>
    %103 = tpu.concatenate %60, %102 in 0 : vector<8x32xbf16>, vector<8x32xbf16> -> vector<16x32xbf16>
    %c0_34 = arith.constant 0 : index
    %c0_35 = arith.constant 0 : index
    %104 = vector.load %arg12[%c0_34, %c0_35] : memref<6x32xf32, #tpu.memory_space<vmem>>, vector<6x32xf32>
    %105 = vector.extract_strided_slice %104 {offsets = [0, 0], sizes = [1, 32], strides = [1, 1]} : vector<6x32xf32> to vector<1x32xf32>
    %106 = vector.extract_strided_slice %104 {offsets = [1, 0], sizes = [1, 32], strides = [1, 1]} : vector<6x32xf32> to vector<1x32xf32>
    %107 = vector.extract_strided_slice %104 {offsets = [2, 0], sizes = [1, 32], strides = [1, 1]} : vector<6x32xf32> to vector<1x32xf32>
    %108 = vector.extract_strided_slice %104 {offsets = [3, 0], sizes = [1, 32], strides = [1, 1]} : vector<6x32xf32> to vector<1x32xf32>
    %109 = vector.extract_strided_slice %104 {offsets = [4, 0], sizes = [1, 32], strides = [1, 1]} : vector<6x32xf32> to vector<1x32xf32>
    %110 = vector.extract_strided_slice %104 {offsets = [5, 0], sizes = [1, 32], strides = [1, 1]} : vector<6x32xf32> to vector<1x32xf32>
    %c0_36 = arith.constant 0 : index
    %c0_37 = arith.constant 0 : index
    %111 = vector.load %arg8[%c0_36, %c0_37] : memref<32x32xbf16, #tpu.memory_space<vmem>>, vector<32x32xbf16>
    %cst_38 = arith.constant dense<0.000000e+00> : vector<16x32xf32>
    %112 = tpu.matmul %103, %111, %cst_38 {dimension_numbers = #tpu.dot_dimension_numbers<[1], [0], [0], [1], [0, 0, 1, 1], [], []>} : vector<16x32xbf16>, vector<32x32xbf16>, vector<16x32xf32> -> vector<16x32xf32>
    %113 = vector.broadcast %105 : vector<1x32xf32> to vector<16x32xf32>
    %114 = arith.addf %112, %113 : vector<16x32xf32>
    %115 = arith.addf %114, %0 : vector<16x32xf32>
    %cst_39 = arith.constant dense<0.000000e+00> : vector<16xf32>
    %116 = vector.multi_reduction <add>, %115, %cst_39 [1] : vector<16x32xf32> to vector<16xf32>
    %117 = vector.shape_cast %116 : vector<16xf32> to vector<16x1xf32>
    %cst_40 = arith.constant 3.200000e+01 : f32
    %118 = vector.broadcast %cst_40 : f32 to vector<16x1xf32>
    %119 = arith.divf %117, %118 : vector<16x1xf32>
    %120 = vector.broadcast %119 : vector<16x1xf32> to vector<16x32xf32>
    %121 = arith.subf %115, %120 : vector<16x32xf32>
    %122 = arith.mulf %121, %121 : vector<16x32xf32>
    %cst_41 = arith.constant dense<0.000000e+00> : vector<16xf32>
    %123 = vector.multi_reduction <add>, %122, %cst_41 [1] : vector<16x32xf32> to vector<16xf32>
    %124 = vector.shape_cast %123 : vector<16xf32> to vector<16x1xf32>
    %cst_42 = arith.constant 3.200000e+01 : f32
    %125 = vector.broadcast %cst_42 : f32 to vector<16x1xf32>
    %126 = arith.divf %124, %125 : vector<16x1xf32>
    %cst_43 = arith.constant 9.99999974E-6 : f32
    %127 = vector.broadcast %cst_43 : f32 to vector<16x1xf32>
    %128 = arith.addf %126, %127 : vector<16x1xf32>
    %129 = math.rsqrt %128 : vector<16x1xf32>
    %130 = vector.broadcast %129 : vector<16x1xf32> to vector<16x32xf32>
    %131 = arith.mulf %121, %130 : vector<16x32xf32>
    %132 = vector.broadcast %106 : vector<1x32xf32> to vector<16x32xf32>
    %133 = arith.mulf %131, %132 : vector<16x32xf32>
    %134 = vector.broadcast %107 : vector<1x32xf32> to vector<16x32xf32>
    %135 = arith.addf %133, %134 : vector<16x32xf32>
    %136 = arith.truncf %135 : vector<16x32xf32> to vector<16x32xbf16>
    %c0_44 = arith.constant 0 : index
    %c0_45 = arith.constant 0 : index
    %137 = vector.load %arg9[%c0_44, %c0_45] : memref<32x128xbf16, #tpu.memory_space<vmem>>, vector<32x128xbf16>
    %cst_46 = arith.constant dense<0.000000e+00> : vector<16x128xf32>
    %138 = tpu.matmul %136, %137, %cst_46 {dimension_numbers = #tpu.dot_dimension_numbers<[1], [0], [0], [1], [0, 0, 1, 1], [], []>} : vector<16x32xbf16>, vector<32x128xbf16>, vector<16x128xf32> -> vector<16x128xf32>
    %c0_47 = arith.constant 0 : index
    %c0_48 = arith.constant 0 : index
    %139 = vector.load %arg11[%c0_47, %c0_48] : memref<1x128xf32, #tpu.memory_space<vmem>>, vector<1x128xf32>
    %140 = vector.broadcast %139 : vector<1x128xf32> to vector<16x128xf32>
    %141 = arith.addf %138, %140 : vector<16x128xf32>
    %cst_49 = arith.constant 0.000000e+00 : f32
    %142 = vector.broadcast %cst_49 : f32 to vector<16x128xf32>
    %143 = arith.maximumf %141, %142 : vector<16x128xf32>
    %144 = arith.truncf %143 : vector<16x128xf32> to vector<16x128xbf16>
    %c0_50 = arith.constant 0 : index
    %c0_51 = arith.constant 0 : index
    %145 = vector.load %arg10[%c0_50, %c0_51] : memref<128x32xbf16, #tpu.memory_space<vmem>>, vector<128x32xbf16>
    %cst_52 = arith.constant dense<0.000000e+00> : vector<16x32xf32>
    %146 = tpu.matmul %144, %145, %cst_52 {dimension_numbers = #tpu.dot_dimension_numbers<[1], [0], [0], [1], [0, 0, 1, 1], [], []>} : vector<16x128xbf16>, vector<128x32xbf16>, vector<16x32xf32> -> vector<16x32xf32>
    %147 = vector.broadcast %108 : vector<1x32xf32> to vector<16x32xf32>
    %148 = arith.addf %146, %147 : vector<16x32xf32>
    %149 = arith.addf %148, %135 : vector<16x32xf32>
    %cst_53 = arith.constant dense<0.000000e+00> : vector<16xf32>
    %150 = vector.multi_reduction <add>, %149, %cst_53 [1] : vector<16x32xf32> to vector<16xf32>
    %151 = vector.shape_cast %150 : vector<16xf32> to vector<16x1xf32>
    %cst_54 = arith.constant 3.200000e+01 : f32
    %152 = vector.broadcast %cst_54 : f32 to vector<16x1xf32>
    %153 = arith.divf %151, %152 : vector<16x1xf32>
    %154 = vector.broadcast %153 : vector<16x1xf32> to vector<16x32xf32>
    %155 = arith.subf %149, %154 : vector<16x32xf32>
    %156 = arith.mulf %155, %155 : vector<16x32xf32>
    %cst_55 = arith.constant dense<0.000000e+00> : vector<16xf32>
    %157 = vector.multi_reduction <add>, %156, %cst_55 [1] : vector<16x32xf32> to vector<16xf32>
    %158 = vector.shape_cast %157 : vector<16xf32> to vector<16x1xf32>
    %cst_56 = arith.constant 3.200000e+01 : f32
    %159 = vector.broadcast %cst_56 : f32 to vector<16x1xf32>
    %160 = arith.divf %158, %159 : vector<16x1xf32>
    %cst_57 = arith.constant 9.99999974E-6 : f32
    %161 = vector.broadcast %cst_57 : f32 to vector<16x1xf32>
    %162 = arith.addf %160, %161 : vector<16x1xf32>
    %163 = math.rsqrt %162 : vector<16x1xf32>
    %164 = vector.broadcast %163 : vector<16x1xf32> to vector<16x32xf32>
    %165 = arith.mulf %155, %164 : vector<16x32xf32>
    %166 = vector.broadcast %109 : vector<1x32xf32> to vector<16x32xf32>
    %167 = arith.mulf %165, %166 : vector<16x32xf32>
    %168 = vector.broadcast %110 : vector<1x32xf32> to vector<16x32xf32>
    %169 = arith.addf %167, %168 : vector<16x32xf32>
    %c0_58 = arith.constant 0 : index
    %c0_59 = arith.constant 0 : index
    %170 = vector.load %arg13[%c0_58, %c0_59] : memref<16x32xf32, #tpu.memory_space<vmem>>, vector<16x32xf32>
    tpu.vector_store %arg13[%c0_58, %c0_59], %169 {strides = array<i32>} : memref<16x32xf32, #tpu.memory_space<vmem>>, vector<16x32xf32>,
    return
  }
  func.func @transform_0(%arg0: i32) -> (i32, i32) {
    %c0_i32 = arith.constant 0 : i32
    %c0_i32_0 = arith.constant 0 : i32
    return %arg0, %c0_i32 : i32, i32
  }
  func.func @transform_1(%arg0: i32) -> (i32, i32) {
    %c0_i32 = arith.constant 0 : i32
    %c0_i32_0 = arith.constant 0 : i32
    return %arg0, %c0_i32 : i32, i32
  }
  func.func @transform_2(%arg0: i32) -> (i32, i32) {
    %c0_i32 = arith.constant 0 : i32
    %c0_i32_0 = arith.constant 0 : i32
    return %arg0, %c0_i32 : i32, i32
  }
  func.func @transform_3(%arg0: i32) -> (i32, i32) {
    %c0_i32 = arith.constant 0 : i32
    %c0_i32_0 = arith.constant 0 : i32
    %c0_i32_1 = arith.constant 0 : i32
    return %c0_i32, %c0_i32_0 : i32, i32
  }
  func.func @transform_4(%arg0: i32) -> (i32, i32) {
    %c0_i32 = arith.constant 0 : i32
    %c0_i32_0 = arith.constant 0 : i32
    %c0_i32_1 = arith.constant 0 : i32
    return %c0_i32, %c0_i32_0 : i32, i32
  }
  func.func @transform_5(%arg0: i32) -> (i32, i32) {
    %c0_i32 = arith.constant 0 : i32
    %c0_i32_0 = arith.constant 0 : i32
    %c0_i32_1 = arith.constant 0 : i32
    return %c0_i32, %c0_i32_0 : i32, i32
  }
  func.func @transform_6(%arg0: i32) -> (i32, i32) {
    %c0_i32 = arith.constant 0 : i32
    %c0_i32_0 = arith.constant 0 : i32
    %c0_i32_1 = arith.constant 0 : i32
    return %c0_i32, %c0_i32_0 : i32, i32
  }
  func.func @transform_7(%arg0: i32) -> (i32, i32) {
    %c0_i32 = arith.constant 0 : i32
    %c0_i32_0 = arith.constant 0 : i32
    %c0_i32_1 = arith.constant 0 : i32
    return %c0_i32, %c0_i32_0 : i32, i32
  }
  func.func @transform_8(%arg0: i32) -> (i32, i32) {
    %c0_i32 = arith.constant 0 : i32
    %c0_i32_0 = arith.constant 0 : i32
    %c0_i32_1 = arith.constant 0 : i32
    return %c0_i32, %c0_i32_0 : i32, i32
  }
  func.func @transform_9(%arg0: i32) -> (i32, i32) {
    %c0_i32 = arith.constant 0 : i32
    %c0_i32_0 = arith.constant 0 : i32
    %c0_i32_1 = arith.constant 0 : i32
    return %c0_i32, %c0_i32_0 : i32, i32
  }
  func.func @transform_10(%arg0: i32) -> (i32, i32) {
    %c0_i32 = arith.constant 0 : i32
    %c0_i32_0 = arith.constant 0 : i32
    %c0_i32_1 = arith.constant 0 : i32
    return %c0_i32, %c0_i32_0 : i32, i32
  }
  func.func @transform_11(%arg0: i32) -> (i32, i32) {
    %c0_i32 = arith.constant 0 : i32
    %c0_i32_0 = arith.constant 0 : i32
    %c0_i32_1 = arith.constant 0 : i32
    return %c0_i32, %c0_i32_0 : i32, i32
  }
  func.func @transform_12(%arg0: i32) -> (i32, i32) {
    %c0_i32 = arith.constant 0 : i32
    %c0_i32_0 = arith.constant 0 : i32
    return %arg0, %c0_i32 : i32, i32
  }
}

</mosaic_0001>

<llo_original>
// kernel: tpu_custom_call.1
$region0: #{tpu_custom_call.1}
  #allocation0 [shape = 'u32[]', space=smem, size = 0x4, offset = 0x4, fixed_abs, tag = 'smem constant byte address 0x4 - core index']
  #allocation1 [shape = 'u32[72,128]{1,0:T(1,128)}', space=vmem, size = 0x9000, scoped, tag = 'internal scratch']
  %s0 = inlined_call_operand.vmem [shape: f32[16,32], index: 0, kind: input, shape index: {}]
  %s1 = inlined_call_operand.hbm [shape: bf16[16,32], index: 1, kind: input, shape index: {}]
  %s2 = inlined_call_operand.hbm [shape: bf16[16,32], index: 2, kind: input, shape index: {}]
  %s3 = inlined_call_operand.hbm [shape: s32[8,8], index: 3, kind: input, shape index: {}]
  %s4 = inlined_call_operand.vmem [shape: bf16[32,32], index: 4, kind: input, shape index: {}]
  %s5 = inlined_call_operand.vmem [shape: bf16[32,32], index: 5, kind: input, shape index: {}]
  %s6 = inlined_call_operand.vmem [shape: bf16[32,32], index: 6, kind: input, shape index: {}]
  %s7 = inlined_call_operand.vmem [shape: bf16[32,32], index: 7, kind: input, shape index: {}]
  %s8 = inlined_call_operand.hbm [shape: bf16[32,128], index: 8, kind: input, shape index: {}]
  %s9 = inlined_call_operand.vmem [shape: bf16[128,32], index: 9, kind: input, shape index: {}]
  %s10 = inlined_call_operand.vmem [shape: f32[1,128], index: 10, kind: input, shape index: {}]
  %s11 = inlined_call_operand.vmem [shape: f32[6,32], index: 11, kind: input, shape index: {}]
  %s12 = inlined_call_operand.hbm [shape: f32[16,32], index: 12, kind: output, shape index: {}]
  %s13 = sld [smem:[#allocation0]]
  $region74: #{tpu_custom_call.1} parent=0
    _
  %s15 = ssub.s32 1, %s13
  %s16 = scalar_select 0, %s15, %s13
  $region1: #{tpu_custom_call.1} parent=0
    #allocation2 [shape = 'u8[4096]{0}', space=vmem, size = 0x1000, scoped, tag = 'input window, operand 1, single buffered']
    #allocation3 [shape = 's32[1]{0}', space=sflag, size = 0x4, scoped, tag = 'scoped memory for tpu_custom_call.1']
    #allocation4 [shape = 's32[1]{0}', space=sflag, size = 0x4, scoped, tag = 'scoped memory for tpu_custom_call.1']
    #allocation5 [shape = 'u8[4096]{0}', space=vmem, size = 0x1000, scoped, tag = 'input window, operand 2, single buffered']
    #allocation6 [shape = 's32[1]{0}', space=sflag, size = 0x4, scoped, tag = 'scoped memory for tpu_custom_call.1']
    #allocation7 [shape = 'u8[4096]{0}', space=vmem, size = 0x1000, scoped, tag = 'input window, operand 3, single buffered']
    #allocation8 [shape = 'u8[8192]{0}', space=vmem, size = 0x2000, scoped, tag = 'input window, operand 8, single buffered']
    #allocation9 [shape = 's32[1]{0}', space=sflag, size = 0x4, scoped, tag = 'scoped memory for tpu_custom_call.1']
    #allocation10 [shape = 'u8[8192]{0}', space=vmem, size = 0x2000, scoped, tag = 'output window, operand 0, single buffered']
    %17 = vsyncpa [#allocation3], 0
    %18 = vsyncpa [#allocation6], 0
    %19 = vsyncpa [#allocation9], 0
    %20 = vsyncpa [#allocation4], 0
    // Predicated region
    $region2: #{tpu_custom_call.1} parent=1 // pred_check
      _
    $region3: #{tpu_custom_call.1} parent=1 // pred_check_branch
      %22 = sbr.rel (0) target = $region5
    $region4: #{tpu_custom_call.1} parent=1 // pred_region
      _
    $region5: #{tpu_custom_call.1} parent=1 // pred_fallthru
      _
    // Predicated region
    $region6: #{tpu_custom_call.1} parent=1 // pred_check
      _
    $region7: #{tpu_custom_call.1} parent=1 // pred_check_branch
      %24 = sbr.rel (0) target = $region9
    $region8: #{tpu_custom_call.1} parent=1 // pred_region
      %26 = vsyncadd [#allocation3], 0
      %s27 = sshll.u32 %s1, 4
      %s28 = int_to_ptr.hbm [resolvable:$true] %s27
      %s29 = sshll.u32 [#allocation2], 4
      %s30 = int_to_ptr.vmem [resolvable:$true] %s29
      %35 = dma.hbm_to_vmem [thread:$0]  %s28, 128, %s30, [#allocation3], 64, 64, 4
    $region9: #{tpu_custom_call.1} parent=1 // pred_fallthru
      _
    // Predicated region
    $region10: #{tpu_custom_call.1} parent=1 // pred_check
      _
    $region11: #{tpu_custom_call.1} parent=1 // pred_check_branch
      %37 = sbr.rel (0) target = $region13
    $region12: #{tpu_custom_call.1} parent=1 // pred_region
      %39 = vsyncadd [#allocation6], 0
      %s40 = sshll.u32 %s2, 4
      %s41 = int_to_ptr.hbm [resolvable:$true] %s40
      %s42 = sshll.u32 [#allocation5], 4
      %s43 = int_to_ptr.vmem [resolvable:$true] %s42
      %48 = dma.hbm_to_vmem [thread:$0]  %s41, 128, %s43, [#allocation6], 64, 64, 4
    $region13: #{tpu_custom_call.1} parent=1 // pred_fallthru
      _
    // Predicated region
    $region14: #{tpu_custom_call.1} parent=1 // pred_check
      _
    $region15: #{tpu_custom_call.1} parent=1 // pred_check_branch
      %50 = sbr.rel (0) target = $region17
    $region16: #{tpu_custom_call.1} parent=1 // pred_region
      %52 = vsyncadd [#allocation6], 0
      %s54 = sshll.u32 %s3, 4
      %s55 = int_to_ptr.hbm [resolvable:$true] %s54
      %s56 = sshll.u32 [#allocation7], 4
      %s57 = int_to_ptr.vmem [resolvable:$true] %s56
      %59 = dma.hbm_to_vmem [thread:$0]  %s55, 128, %s57, [#allocation6]
    $region17: #{tpu_custom_call.1} parent=1 // pred_fallthru
      _
    // Predicated region
    $region18: #{tpu_custom_call.1} parent=1 // pred_check
      _
    $region19: #{tpu_custom_call.1} parent=1 // pred_check_branch
      %61 = sbr.rel (0) target = $region21
    $region20: #{tpu_custom_call.1} parent=1 // pred_region
      _
    $region21: #{tpu_custom_call.1} parent=1 // pred_fallthru
      _
    // Predicated region
    $region22: #{tpu_custom_call.1} parent=1 // pred_check
      _
    $region23: #{tpu_custom_call.1} parent=1 // pred_check_branch
      %63 = sbr.rel (0) target = $region25
    $region24: #{tpu_custom_call.1} parent=1 // pred_region
      _
    $region25: #{tpu_custom_call.1} parent=1 // pred_fallthru
      _
    // Predicated region
    $region26: #{tpu_custom_call.1} parent=1 // pred_check
      _
    $region27: #{tpu_custom_call.1} parent=1 // pred_check_branch
      %65 = sbr.rel (0) target = $region29
    $region28: #{tpu_custom_call.1} parent=1 // pred_region
      _
    $region29: #{tpu_custom_call.1} parent=1 // pred_fallthru
      _
    // Predicated region
    $region30: #{tpu_custom_call.1} parent=1 // pred_check
      _
    $region31: #{tpu_custom_call.1} parent=1 // pred_check_branch
      %67 = sbr.rel (0) target = $region33
    $region32: #{tpu_custom_call.1} parent=1 // pred_region
      _
    $region33: #{tpu_custom_call.1} parent=1 // pred_fallthru
      _
    // Predicated region
    $region34: #{tpu_custom_call.1} parent=1 // pred_check
      _
    $region35: #{tpu_custom_call.1} parent=1 // pred_check_branch
      %69 = sbr.rel (0) target = $region37
    $region36: #{tpu_custom_call.1} parent=1 // pred_region
      %71 = vsyncadd [#allocation9], 0
      %s72 = sshll.u32 %s8, 4
      %s73 = int_to_ptr.hbm [resolvable:$true] %s72
      %s74 = sshll.u32 [#allocation8], 4
      %s75 = int_to_ptr.vmem [resolvable:$true] %s74
      %80 = dma.hbm_to_vmem [thread:$0]  %s73, 256, %s75, [#allocation9], 64, 64, 4
    $region37: #{tpu_custom_call.1} parent=1 // pred_fallthru
      _
    // Predicated region
    $region38: #{tpu_custom_call.1} parent=1 // pred_check
      _
    $region39: #{tpu_custom_call.1} parent=1 // pred_check_branch
      %82 = sbr.rel (0) target = $region41
    $region40: #{tpu_custom_call.1} parent=1 // pred_region
      _
    $region41: #{tpu_custom_call.1} parent=1 // pred_fallthru
      _
    // Predicated region
    $region42: #{tpu_custom_call.1} parent=1 // pred_check
      _
    $region43: #{tpu_custom_call.1} parent=1 // pred_check_branch
      %84 = sbr.rel (0) target = $region45
    $region44: #{tpu_custom_call.1} parent=1 // pred_region
      _
    $region45: #{tpu_custom_call.1} parent=1 // pred_fallthru
      _
    // Predicated region
    $region46: #{tpu_custom_call.1} parent=1 // pred_check
      _
    $region47: #{tpu_custom_call.1} parent=1 // pred_check_branch
      %86 = sbr.rel (0) target = $region49
    $region48: #{tpu_custom_call.1} parent=1 // pred_region
      _
    $region49: #{tpu_custom_call.1} parent=1 // pred_fallthru
      _
    // Predicated region
    $region50: #{tpu_custom_call.1} parent=1 // pred_check
      _
    $region51: #{tpu_custom_call.1} parent=1 // pred_check_branch
      %88 = sbr.rel (0) target = $region53
    $region52: #{tpu_custom_call.1} parent=1 // pred_region
      %90 = dma.done [#allocation3], 128
    $region53: #{tpu_custom_call.1} parent=1 // pred_fallthru
      _
    // Predicated region
    $region54: #{tpu_custom_call.1} parent=1 // pred_check
      _
    $region55: #{tpu_custom_call.1} parent=1 // pred_check_branch
      %92 = sbr.rel (0) target = $region57
    $region56: #{tpu_custom_call.1} parent=1 // pred_region
      %94 = dma.done [#allocation6], 128
    $region57: #{tpu_custom_call.1} parent=1 // pred_fallthru
      _
    // Predicated region
    $region58: #{tpu_custom_call.1} parent=1 // pred_check
      _
    $region59: #{tpu_custom_call.1} parent=1 // pred_check_branch
      %96 = sbr.rel (0) target = $region61
    $region60: #{tpu_custom_call.1} parent=1 // pred_region
      %98 = dma.done [#allocation6], 128
    $region61: #{tpu_custom_call.1} parent=1 // pred_fallthru
      _
    // Predicated region
    $region62: #{tpu_custom_call.1} parent=1 // pred_check
      _
    $region63: #{tpu_custom_call.1} parent=1 // pred_check_branch
      %100 = sbr.rel (0) target = $region65
    $region64: #{tpu_custom_call.1} parent=1 // pred_region
      %102 = dma.done [#allocation9], 256
    $region65: #{tpu_custom_call.1} parent=1 // pred_fallthru
      _
    %v104 = vld [vmem:[%s0] sm:$0xff]
    %v105 = vld [vmem:[%s0 + $0x8] sm:$0xff]
    %v106 = vpack.c.bf16 %v105, %v104
    %v107 = vld [vmem:[#allocation2] sm:$0xf]
    %v108 = vld [vmem:[#allocation2 + $0x4] sm:$0xf]
    %v109 = vld [vmem:[#allocation5] sm:$0xf]
    %v110 = vld [vmem:[#allocation5 + $0x4] sm:$0xf]
    %v111 = vld [vmem:[%s4] sm:$0xf]
    %v112 = vld [vmem:[%s4 + $0x4] sm:$0xf]
    %v113 = vld [vmem:[%s4 + $0x8] sm:$0xf]
    %v114 = vld [vmem:[%s4 + $0xc] sm:$0xf]
    %v119 = vunpack.c.l.b16 %v111
    %v120 = vunpack.c.l.b16 %v112
    %v121 = vunpack.c.l.b16 %v113
    %v122 = vunpack.c.l.b16 %v114
    %v123 = vpack.c.b16 %v120, %v119
    %v124 = vpack.c.b16 %v122, %v121
    %vm127 = vcmask 261120
    %v129 = vsel %vm127, %v106, 0
    %131 = vmatpush.bf16.msra.mxu0 0
    %132 = vmatpush.bf16.msra.mxu0 0
    %133 = vmatpush.bf16.msra.mxu0 0
    %134 = vmatpush.bf16.msra.mxu0 0
    %135 = vmatpush.bf16.msra.mxu0 0
    %136 = vmatpush.bf16.msra.mxu0 0
    %137 = vmatpush.bf16.msra.mxu0 %v124
    %138 = vmatpush.bf16.msra.mxu0 %v123
    %139 = vmatmul.bf16.gmra.mxu0 %v129
    %v140 = vpop.f32.mrf.mxu0
    %v141 = vadd.f32 0.0, %v140
    %v142 = vpop.f32.mrf.mxu0
    %v143 = vadd.f32 0.0, %v142
    %144 = vdwg.mxu0
    %v145 = vmul.f32 %v141, 0.17677669
    %v146 = vmul.f32 %v143, 0.17677669
    %v147 = vpack.c.bf16 %v145, %v145
    %v148 = vpack.c.bf16 %v146, %v146
    %v149 = vld [vmem:[%s5] sm:$0xf]
    %v150 = vld [vmem:[%s5 + $0x4] sm:$0xf]
    %v151 = vld [vmem:[%s5 + $0x8] sm:$0xf]
    %v152 = vld [vmem:[%s5 + $0xc] sm:$0xf]
    %v155 = vunpack.c.l.b16 %v107
    %v156 = vunpack.c.l.b16 %v108
    %v157 = vpack.c.b16 %v156, %v155
    %v162 = vunpack.c.l.b16 %v149
    %v163 = vunpack.c.l.b16 %v150
    %v164 = vunpack.c.l.b16 %v151
    %v165 = vunpack.c.l.b16 %v152
    %v166 = vpack.c.b16 %v163, %v162
    %v167 = vpack.c.b16 %v165, %v164
    %v171 = vsel %vm127, %v157, 0
    %173 = vmatpush.bf16.msra.mxu0 0
    %174 = vmatpush.bf16.msra.mxu0 0
    %175 = vmatpush.bf16.msra.mxu0 0
    %176 = vmatpush.bf16.msra.mxu0 0
    %177 = vmatpush.bf16.msra.mxu0 0
    %178 = vmatpush.bf16.msra.mxu0 0
    %179 = vmatpush.bf16.msra.mxu0 %v167
    %180 = vmatpush.bf16.msra.mxu0 %v166
    %181 = vmatmul.bf16.gmra.mxu0 %v171
    %v182 = vpop.f32.mrf.mxu0
    %v183 = vadd.f32 0.0, %v182
    %v184 = vpop.f32.mrf.mxu0
    %v185 = vadd.f32 0.0, %v184
    %186 = vdwg.mxu0
    %v187 = vpack.c.bf16 %v183, %v183
    %v188 = vpack.c.bf16 %v185, %v185
    %v189 = vld [vmem:[%s6] sm:$0xf]
    %v190 = vld [vmem:[%s6 + $0x4] sm:$0xf]
    %v191 = vld [vmem:[%s6 + $0x8] sm:$0xf]
    %v192 = vld [vmem:[%s6 + $0xc] sm:$0xf]
    %v195 = vunpack.c.l.b16 %v109
    %v196 = vunpack.c.l.b16 %v110
    %v197 = vpack.c.b16 %v196, %v195
    %v202 = vunpack.c.l.b16 %v189
    %v203 = vunpack.c.l.b16 %v190
    %v204 = vunpack.c.l.b16 %v191
    %v205 = vunpack.c.l.b16 %v192
    %v206 = vpack.c.b16 %v203, %v202
    %v207 = vpack.c.b16 %v205, %v204
    %v211 = vsel %vm127, %v197, 0
    %213 = vmatpush.bf16.msra.mxu0 0
    %214 = vmatpush.bf16.msra.mxu0 0
    %215 = vmatpush.bf16.msra.mxu0 0
    %216 = vmatpush.bf16.msra.mxu0 0
    %217 = vmatpush.bf16.msra.mxu0 0
    %218 = vmatpush.bf16.msra.mxu0 0
    %219 = vmatpush.bf16.msra.mxu0 %v207
    %220 = vmatpush.bf16.msra.mxu0 %v206
    %221 = vmatmul.bf16.gmra.mxu0 %v211
    %v222 = vpop.f32.mrf.mxu0
    %v223 = vadd.f32 0.0, %v222
    %v224 = vpop.f32.mrf.mxu0
    %v225 = vadd.f32 0.0, %v224
    %226 = vdwg.mxu0
    %v227 = vpack.c.bf16 %v223, %v223
    %v228 = vpack.c.bf16 %v225, %v225
    %v229 = vld [vmem:[#allocation7] sm:$0xff]
    %vm230 = vcmp.eq.s32.totalorder %v229, 0
    %vm231 = vcmask 130048
    %v233 = vsel %vm231, %v147, 0
    %v236 = vsel %vm231, %v187, 0
    %238 = vmatpush.bf16.xpose.msra.mxu0 0
    %239 = vmatpush.bf16.xpose.msra.mxu0 0
    %240 = vmatpush.bf16.xpose.msra.mxu0 0
    %241 = vmatpush.bf16.xpose.msra.mxu0 0
    %242 = vmatpush.bf16.xpose.msra.mxu0 0
    %243 = vmatpush.bf16.xpose.msra.mxu0 0
    %244 = vmatpush.bf16.xpose.msra.mxu0 0
    %245 = vmatpush.bf16.xpose.msra.mxu0 %v236
    %246 = vmatmul.bf16.gmra.mxu0 %v233
    %v247 = vpop.f32.mrf.mxu0
    %v248 = vadd.f32 0.0, %v247
    %v249 = vpop.f32.mrf.mxu0
    %250 = vdwg.mxu0
    %v251 = vsel %vm230, -1.767767e+19, %v248
    %vm252 = vcmask 64512
    %v253 = vsel %vm252, %v251, -inf
    %254 = vmax.xlane.f32.xlu0 %v253
    %v255 = vpop.xlane.xlu0 %254
    %v256 = vsub.f32 %v251, %v255
    %v257 = vmul.f32 %v256, 1.442695
    %v258 = vpow.pop %v257
    %v259 = vsel %vm252, %v258, 0.0
    %260 = vadd.xlane.f32.xlu0 %v259
    %v261 = vpop.xlane.xlu0 %260
    %v262 = vrcp.pop %v261
    %v263 = vmul.f32 %v258, %v262
    %v264 = vpack.c.bf16 %v263, %v263
    %v266 = vsel %vm252, %v264, 0
    %vm268 = vcmask 1043456
    %v270 = vsel %vm268, %v227, 0
    %272 = vmatpush.bf16.msra.mxu0 0
    %273 = vmatpush.bf16.msra.mxu0 0
    %274 = vmatpush.bf16.msra.mxu0 0
    %275 = vmatpush.bf16.msra.mxu0 0
    %276 = vmatpush.bf16.msra.mxu0 0
    %277 = vmatpush.bf16.msra.mxu0 0
    %278 = vmatpush.bf16.msra.mxu0 0
    %279 = vmatpush.bf16.msra.mxu0 %v270
    %280 = vmatmul.bf16.gmra.mxu0 %v266
    %v281 = vpop.f32.mrf.mxu0
    %v282 = vadd.f32 0.0, %v281
    %v283 = vpop.f32.mrf.mxu0
    %284 = vdwg.mxu0
    %v285 = vpack.c.bf16 %v282, %v282
    %v287 = vunpack.c.l.b16 %v147
    %v288 = vpack.c.b16 %v287, %v287
    %289 = vrot.lane.b32.xlu0 %v288, 112
    %v290 = vpop.permute.xlu0 %289
    %v292 = vunpack.c.l.b16 %v187
    %v293 = vpack.c.b16 %v292, %v292
    %294 = vrot.lane.b32.xlu0 %v293, 112
    %v295 = vpop.permute.xlu0 %294
    %v297 = vsel %vm231, %v290, 0
    %v300 = vsel %vm231, %v295, 0
    %302 = vmatpush.bf16.xpose.msra.mxu0 0
    %303 = vmatpush.bf16.xpose.msra.mxu0 0
    %304 = vmatpush.bf16.xpose.msra.mxu0 0
    %305 = vmatpush.bf16.xpose.msra.mxu0 0
    %306 = vmatpush.bf16.xpose.msra.mxu0 0
    %307 = vmatpush.bf16.xpose.msra.mxu0 0
    %308 = vmatpush.bf16.xpose.msra.mxu0 0
    %309 = vmatpush.bf16.xpose.msra.mxu0 %v300
    %310 = vmatmul.bf16.gmra.mxu0 %v297
    %v311 = vpop.f32.mrf.mxu0
    %v312 = vadd.f32 0.0, %v311
    %v313 = vpop.f32.mrf.mxu0
    %314 = vdwg.mxu0
    %v315 = vsel %vm230, -1.767767e+19, %v312
    %v316 = vsel %vm252, %v315, -inf
    %317 = vmax.xlane.f32.xlu0 %v316
    %v318 = vpop.xlane.xlu0 %317
    %v319 = vsub.f32 %v315, %v318
    %v320 = vmul.f32 %v319, 1.442695
    %v321 = vpow.pop %v320
    %v322 = vsel %vm252, %v321, 0.0
    %323 = vadd.xlane.f32.xlu0 %v322
    %v324 = vpop.xlane.xlu0 %323
    %v325 = vrcp.pop %v324
    %v326 = vmul.f32 %v321, %v325
    %v327 = vpack.c.bf16 %v326, %v326
    %v329 = vunpack.c.l.b16 %v227
    %v330 = vpack.c.b16 %v329, %v329
    %331 = vrot.lane.b32.xlu0 %v330, 112
    %v332 = vpop.permute.xlu0 %331
    %v334 = vsel %vm252, %v327, 0
    %v337 = vsel %vm268, %v332, 0
    %339 = vmatpush.bf16.msra.mxu0 0
    %340 = vmatpush.bf16.msra.mxu0 0
    %341 = vmatpush.bf16.msra.mxu0 0
    %342 = vmatpush.bf16.msra.mxu0 0
    %343 = vmatpush.bf16.msra.mxu0 0
    %344 = vmatpush.bf16.msra.mxu0 0
    %345 = vmatpush.bf16.msra.mxu0 0
    %346 = vmatpush.bf16.msra.mxu0 %v337
    %347 = vmatmul.bf16.gmra.mxu0 %v334
    %v348 = vpop.f32.mrf.mxu0
    %v349 = vadd.f32 0.0, %v348
    %v350 = vpop.f32.mrf.mxu0
    %351 = vdwg.mxu0
    %v352 = vpack.c.bf16 %v349, %v349
    %v354 = vunpack.c.l.b16 %v352
    %v355 = vpack.c.b16 %v354, %v354
    %356 = vrot.lane.b32.xlu0 %v355, 16
    %v357 = vpop.permute.xlu0 %356
    %v360 = vsel %vm231, %v285, %v357
    %v362 = vsel %vm231, %v148, 0
    %v365 = vsel %vm231, %v188, 0
    %367 = vmatpush.bf16.xpose.msra.mxu0 0
    %368 = vmatpush.bf16.xpose.msra.mxu0 0
    %369 = vmatpush.bf16.xpose.msra.mxu0 0
    %370 = vmatpush.bf16.xpose.msra.mxu0 0
    %371 = vmatpush.bf16.xpose.msra.mxu0 0
    %372 = vmatpush.bf16.xpose.msra.mxu0 0
    %373 = vmatpush.bf16.xpose.msra.mxu0 0
    %374 = vmatpush.bf16.xpose.msra.mxu0 %v365
    %375 = vmatmul.bf16.gmra.mxu0 %v362
    %v376 = vpop.f32.mrf.mxu0
    %v377 = vadd.f32 0.0, %v376
    %v378 = vpop.f32.mrf.mxu0
    %379 = vdwg.mxu0
    %v380 = vsel %vm230, -1.767767e+19, %v377
    %v381 = vsel %vm252, %v380, -inf
    %382 = vmax.xlane.f32.xlu0 %v381
    %v383 = vpop.xlane.xlu0 %382
    %v384 = vsub.f32 %v380, %v383
    %v385 = vmul.f32 %v384, 1.442695
    %v386 = vpow.pop %v385
    %v387 = vsel %vm252, %v386, 0.0
    %388 = vadd.xlane.f32.xlu0 %v387
    %v389 = vpop.xlane.xlu0 %388
    %v390 = vrcp.pop %v389
    %v391 = vmul.f32 %v386, %v390
    %v392 = vpack.c.bf16 %v391, %v391
    %v394 = vsel %vm252, %v392, 0
    %v397 = vsel %vm268, %v228, 0
    %399 = vmatpush.bf16.msra.mxu0 0
    %400 = vmatpush.bf16.msra.mxu0 0
    %401 = vmatpush.bf16.msra.mxu0 0
    %402 = vmatpush.bf16.msra.mxu0 0
    %403 = vmatpush.bf16.msra.mxu0 0
    %404 = vmatpush.bf16.msra.mxu0 0
    %405 = vmatpush.bf16.msra.mxu0 0
    %406 = vmatpush.bf16.msra.mxu0 %v397
    %407 = vmatmul.bf16.gmra.mxu0 %v394
    %v408 = vpop.f32.mrf.mxu0
    %v409 = vadd.f32 0.0, %v408
    %v410 = vpop.f32.mrf.mxu0
    %411 = vdwg.mxu0
    %v412 = vpack.c.bf16 %v409, %v409
    %v414 = vunpack.c.l.b16 %v148
    %v415 = vpack.c.b16 %v414, %v414
    %416 = vrot.lane.b32.xlu0 %v415, 112
    %v417 = vpop.permute.xlu0 %416
    %v419 = vunpack.c.l.b16 %v188
    %v420 = vpack.c.b16 %v419, %v419
    %421 = vrot.lane.b32.xlu0 %v420, 112
    %v422 = vpop.permute.xlu0 %421
    %v424 = vsel %vm231, %v417, 0
    %v427 = vsel %vm231, %v422, 0
    %429 = vmatpush.bf16.xpose.msra.mxu0 0
    %430 = vmatpush.bf16.xpose.msra.mxu0 0
    %431 = vmatpush.bf16.xpose.msra.mxu0 0
    %432 = vmatpush.bf16.xpose.msra.mxu0 0
    %433 = vmatpush.bf16.xpose.msra.mxu0 0
    %434 = vmatpush.bf16.xpose.msra.mxu0 0
    %435 = vmatpush.bf16.xpose.msra.mxu0 0
    %436 = vmatpush.bf16.xpose.msra.mxu0 %v427
    %437 = vmatmul.bf16.gmra.mxu0 %v424
    %v438 = vpop.f32.mrf.mxu0
    %v439 = vadd.f32 0.0, %v438
    %v440 = vpop.f32.mrf.mxu0
    %441 = vdwg.mxu0
    %v442 = vsel %vm230, -1.767767e+19, %v439
    %v443 = vsel %vm252, %v442, -inf
    %444 = vmax.xlane.f32.xlu0 %v443
    %v445 = vpop.xlane.xlu0 %444
    %v446 = vsub.f32 %v442, %v445
    %v447 = vmul.f32 %v446, 1.442695
    %v448 = vpow.pop %v447
    %v449 = vsel %vm252, %v448, 0.0
    %450 = vadd.xlane.f32.xlu0 %v449
    %v451 = vpop.xlane.xlu0 %450
    %v452 = vrcp.pop %v451
    %v453 = vmul.f32 %v448, %v452
    %v454 = vpack.c.bf16 %v453, %v453
    %v456 = vunpack.c.l.b16 %v228
    %v457 = vpack.c.b16 %v456, %v456
    %458 = vrot.lane.b32.xlu0 %v457, 112
    %v459 = vpop.permute.xlu0 %458
    %v461 = vsel %vm252, %v454, 0
    %v464 = vsel %vm268, %v459, 0
    %466 = vmatpush.bf16.msra.mxu0 0
    %467 = vmatpush.bf16.msra.mxu0 0
    %468 = vmatpush.bf16.msra.mxu0 0
    %469 = vmatpush.bf16.msra.mxu0 0
    %470 = vmatpush.bf16.msra.mxu0 0
    %471 = vmatpush.bf16.msra.mxu0 0
    %472 = vmatpush.bf16.msra.mxu0 0
    %473 = vmatpush.bf16.msra.mxu0 %v464
    %474 = vmatmul.bf16.gmra.mxu0 %v461
    %v475 = vpop.f32.mrf.mxu0
    %v476 = vadd.f32 0.0, %v475
    %v477 = vpop.f32.mrf.mxu0
    %478 = vdwg.mxu0
    %v479 = vpack.c.bf16 %v476, %v476
    %v481 = vunpack.c.l.b16 %v479
    %v482 = vpack.c.b16 %v481, %v481
    %483 = vrot.lane.b32.xlu0 %v482, 16
    %v484 = vpop.permute.xlu0 %483
    %v487 = vsel %vm231, %v412, %v484
    %v489 = vrot.slane %v487, 4
    %v491 = vsel %vm268, %v360, %v489
    %v492 = vld [vmem:[%s11] sm:$0x3f]
    %v493 = vld [vmem:[%s7] sm:$0xf]
    %v494 = vld [vmem:[%s7 + $0x4] sm:$0xf]
    %v495 = vld [vmem:[%s7 + $0x8] sm:$0xf]
    %v496 = vld [vmem:[%s7 + $0xc] sm:$0xf]
    %v497 = vperm.slane %v492, 0
    %v502 = vunpack.c.l.b16 %v493
    %v503 = vunpack.c.l.b16 %v494
    %v504 = vunpack.c.l.b16 %v495
    %v505 = vunpack.c.l.b16 %v496
    %v506 = vpack.c.b16 %v503, %v502
    %v507 = vpack.c.b16 %v505, %v504
    %v510 = vsel %vm127, %v491, 0
    %512 = vmatpush.bf16.msra.mxu0 0
    %513 = vmatpush.bf16.msra.mxu0 0
    %514 = vmatpush.bf16.msra.mxu0 0
    %515 = vmatpush.bf16.msra.mxu0 0
    %516 = vmatpush.bf16.msra.mxu0 0
    %517 = vmatpush.bf16.msra.mxu0 0
    %518 = vmatpush.bf16.msra.mxu0 %v507
    %519 = vmatpush.bf16.msra.mxu0 %v506
    %520 = vmatmul.bf16.gmra.mxu0 %v510
    %v521 = vpop.f32.mrf.mxu0
    %v522 = vadd.f32 %v497, %v521
    %v523 = vpop.f32.mrf.mxu0
    %v524 = vadd.f32 %v497, %v523
    %525 = vdwg.mxu0
    %v526 = vadd.f32 %v522, %v104
    %v527 = vadd.f32 %v524, %v105
    %v528 = vsel %vm127, %v526, 0.0
    %529 = vadd.xlane.f32.xlu0 %v528
    %v530 = vpop.xlane.xlu0 %529
    %v531 = vsel %vm127, %v527, 0.0
    %532 = vadd.xlane.f32.xlu0 %v531
    %v533 = vpop.xlane.xlu0 %532
    %v534 = vrcp.pop 32.0
    %v535 = vmul.f32 32.0, %v534
    %v536 = vsub.f32 1.0, %v535
    %v537 = vmul.f32 %v534, %v536
    %v538 = vadd.f32 %v534, %v537
    %vm539 = vweird.f32 %v534
    %v540 = vsel %vm539, %v534, %v538
    %v541 = vmul.f32 %v530, %v540
    %v542 = vmul.f32 %v533, %v540
    %v543 = vsub.f32 %v526, %v541
    %v544 = vsub.f32 %v527, %v542
    %v545 = vmul.f32 %v543, %v543
    %v546 = vmul.f32 %v544, %v544
    %v547 = vsel %vm127, %v545, 0.0
    %548 = vadd.xlane.f32.xlu0 %v547
    %v549 = vpop.xlane.xlu0 %548
    %v550 = vsel %vm127, %v546, 0.0
    %551 = vadd.xlane.f32.xlu0 %v550
    %v552 = vpop.xlane.xlu0 %551
    %v553 = vmul.f32 %v549, %v540
    %v554 = vmul.f32 %v552, %v540
    %v555 = vadd.f32 %v553, 1e-05
    %v556 = vadd.f32 %v554, 1e-05
    %v557 = vrsqrt.pop %v555
    %v558 = vmul.f32 %v557, %v555
    %v559 = vmul.f32 %v558, %v557
    %v560 = vmul.f32 0.5, %v559
    %v561 = vsub.f32 1.5, %v560
    %v562 = vmul.f32 %v557, %v561
    %vm563 = vweird.f32 %v555
    %vm564 = vweird.f32 %v557
    %vm565 = vmor %vm563, %vm564
    %v566 = vsel %vm565, %v557, %v562
    %v567 = vrsqrt.pop %v556
    %v568 = vmul.f32 %v567, %v556
    %v569 = vmul.f32 %v568, %v567
    %v570 = vmul.f32 0.5, %v569
    %v571 = vsub.f32 1.5, %v570
    %v572 = vmul.f32 %v567, %v571
    %vm573 = vweird.f32 %v556
    %vm574 = vweird.f32 %v567
    %vm575 = vmor %vm573, %vm574
    %v576 = vsel %vm575, %v567, %v572
    %v577 = vmul.f32 %v543, %v566
    %v578 = vmul.f32 %v544, %v576
    %v579 = vperm.slane %v492, 1
    %v580 = vmul.f32 %v577, %v579
    %v581 = vmul.f32 %v578, %v579
    %v582 = vperm.slane %v492, 2
    %v583 = vadd.f32 %v580, %v582
    %v584 = vadd.f32 %v581, %v582
    %v585 = vpack.c.bf16 %v584, %v583
    %v586 = vld [vmem:[#allocation8] sm:$0xf]
    %v587 = vld [vmem:[#allocation8 + $0x4] sm:$0xf]
    %v588 = vld [vmem:[#allocation8 + $0x8] sm:$0xf]
    %v589 = vld [vmem:[#allocation8 + $0xc] sm:$0xf]
    %v590 = vld [vmem:[%s10] sm:$0x1]
    %v592 = vperm.slane %v590, 0
    %v598 = vunpack.c.l.b16 %v586
    %v599 = vunpack.c.l.b16 %v587
    %v600 = vunpack.c.l.b16 %v588
    %v601 = vunpack.c.l.b16 %v589
    %v602 = vpack.c.b16 %v599, %v598
    %v603 = vpack.c.b16 %v601, %v600
    %v607 = vsel %vm127, %v585, 0
    %609 = vmatpush.bf16.msra.mxu0 0
    %610 = vmatpush.bf16.msra.mxu0 0
    %611 = vmatpush.bf16.msra.mxu0 0
    %612 = vmatpush.bf16.msra.mxu0 0
    %613 = vmatpush.bf16.msra.mxu0 0
    %614 = vmatpush.bf16.msra.mxu0 0
    %615 = vmatpush.bf16.msra.mxu0 %v603
    %616 = vmatpush.bf16.msra.mxu0 %v602
    %617 = vmatmul.bf16.gmra.mxu0 %v607
    %v618 = vpop.f32.mrf.mxu0
    %v619 = vadd.f32 %v592, %v618
    %v620 = vpop.f32.mrf.mxu0
    %v621 = vadd.f32 %v592, %v620
    %622 = vdwg.mxu0
    %v623 = vmax.f32 %v619, 0.0
    %v624 = vmax.f32 %v621, 0.0
    %v625 = vpack.c.bf16 %v624, %v623
    %v626 = vld [vmem:[%s9] sm:$0xf]
    %v627 = vld [vmem:[%s9 + $0x4] sm:$0xf]
    %v628 = vld [vmem:[%s9 + $0x8] sm:$0xf]
    %v629 = vld [vmem:[%s9 + $0xc] sm:$0xf]
    %v630 = vld [vmem:[%s9 + $0x10] sm:$0xf]
    %v631 = vld [vmem:[%s9 + $0x14] sm:$0xf]
    %v632 = vld [vmem:[%s9 + $0x18] sm:$0xf]
    %v633 = vld [vmem:[%s9 + $0x1c] sm:$0xf]
    %v634 = vld [vmem:[%s9 + $0x20] sm:$0xf]
    %v635 = vld [vmem:[%s9 + $0x24] sm:$0xf]
    %v636 = vld [vmem:[%s9 + $0x28] sm:$0xf]
    %v637 = vld [vmem:[%s9 + $0x2c] sm:$0xf]
    %v638 = vld [vmem:[%s9 + $0x30] sm:$0xf]
    %v639 = vld [vmem:[%s9 + $0x34] sm:$0xf]
    %v640 = vld [vmem:[%s9 + $0x38] sm:$0xf]
    %v641 = vld [vmem:[%s9 + $0x3c] sm:$0xf]
    %v642 = vperm.slane %v492, 3
    %v659 = vunpack.c.l.b16 %v626
    %v660 = vunpack.c.l.b16 %v627
    %v661 = vunpack.c.l.b16 %v628
    %v662 = vunpack.c.l.b16 %v629
    %v663 = vunpack.c.l.b16 %v630
    %v664 = vunpack.c.l.b16 %v631
    %v665 = vunpack.c.l.b16 %v632
    %v666 = vunpack.c.l.b16 %v633
    %v667 = vunpack.c.l.b16 %v634
    %v668 = vunpack.c.l.b16 %v635
    %v669 = vunpack.c.l.b16 %v636
    %v670 = vunpack.c.l.b16 %v637
    %v671 = vunpack.c.l.b16 %v638
    %v672 = vunpack.c.l.b16 %v639
    %v673 = vunpack.c.l.b16 %v640
    %v674 = vunpack.c.l.b16 %v641
    %v675 = vpack.c.b16 %v660, %v659
    %v676 = vpack.c.b16 %v662, %v661
    %v677 = vpack.c.b16 %v664, %v663
    %v678 = vpack.c.b16 %v666, %v665
    %v679 = vpack.c.b16 %v668, %v667
    %v680 = vpack.c.b16 %v670, %v669
    %v681 = vpack.c.b16 %v672, %v671
    %v682 = vpack.c.b16 %v674, %v673
    %691 = vmatpush.bf16.msra.mxu0 %v682
    %692 = vmatpush.bf16.msra.mxu0 %v681
    %693 = vmatpush.bf16.msra.mxu0 %v680
    %694 = vmatpush.bf16.msra.mxu0 %v679
    %695 = vmatpush.bf16.msra.mxu0 %v678
    %696 = vmatpush.bf16.msra.mxu0 %v677
    %697 = vmatpush.bf16.msra.mxu0 %v676
    %698 = vmatpush.bf16.msra.mxu0 %v675
    %699 = vmatmul.bf16.gmra.mxu0 %v625
    %v700 = vpop.f32.mrf.mxu0
    %v701 = vadd.f32 %v642, %v700
    %v702 = vpop.f32.mrf.mxu0
    %v703 = vadd.f32 %v642, %v702
    %704 = vdwg.mxu0
    %v705 = vadd.f32 %v701, %v583
    %v706 = vadd.f32 %v703, %v584
    %v707 = vsel %vm127, %v705, 0.0
    %708 = vadd.xlane.f32.xlu0 %v707
    %v709 = vpop.xlane.xlu0 %708
    %v710 = vsel %vm127, %v706, 0.0
    %711 = vadd.xlane.f32.xlu0 %v710
    %v712 = vpop.xlane.xlu0 %711
    %v713 = vmul.f32 %v709, %v540
    %v714 = vmul.f32 %v712, %v540
    %v715 = vsub.f32 %v705, %v713
    %v716 = vsub.f32 %v706, %v714
    %v717 = vmul.f32 %v715, %v715
    %v718 = vmul.f32 %v716, %v716
    %v719 = vsel %vm127, %v717, 0.0
    %720 = vadd.xlane.f32.xlu0 %v719
    %v721 = vpop.xlane.xlu0 %720
    %v722 = vsel %vm127, %v718, 0.0
    %723 = vadd.xlane.f32.xlu0 %v722
    %v724 = vpop.xlane.xlu0 %723
    %v725 = vmul.f32 %v721, %v540
    %v726 = vmul.f32 %v724, %v540
    %v727 = vadd.f32 %v725, 1e-05
    %v728 = vadd.f32 %v726, 1e-05
    %v729 = vrsqrt.pop %v727
    %v730 = vmul.f32 %v729, %v727
    %v731 = vmul.f32 %v730, %v729
    %v732 = vmul.f32 0.5, %v731
    %v733 = vsub.f32 1.5, %v732
    %v734 = vmul.f32 %v729, %v733
    %vm735 = vweird.f32 %v727
    %vm736 = vweird.f32 %v729
    %vm737 = vmor %vm735, %vm736
    %v738 = vsel %vm737, %v729, %v734
    %v739 = vrsqrt.pop %v728
    %v740 = vmul.f32 %v739, %v728
    %v741 = vmul.f32 %v740, %v739
    %v742 = vmul.f32 0.5, %v741
    %v743 = vsub.f32 1.5, %v742
    %v744 = vmul.f32 %v739, %v743
    %vm745 = vweird.f32 %v728
    %vm746 = vweird.f32 %v739
    %vm747 = vmor %vm745, %vm746
    %v748 = vsel %vm747, %v739, %v744
    %v749 = vmul.f32 %v715, %v738
    %v750 = vmul.f32 %v716, %v748
    %v751 = vperm.slane %v492, 4
    %v752 = vmul.f32 %v749, %v751
    %v753 = vmul.f32 %v750, %v751
    %v754 = vperm.slane %v492, 5
    %v755 = vadd.f32 %v752, %v754
    %v756 = vadd.f32 %v753, %v754
    %757 = vst.msk [vmem:[#allocation10] sm:$0xff] %vm127, %v755
    %758 = vst.msk [vmem:[#allocation10 + $0x8] sm:$0xff] %vm127, %v756
    // Predicated region
    $region66: #{tpu_custom_call.1} parent=1 // pred_check
      _
    $region67: #{tpu_custom_call.1} parent=1 // pred_check_branch
      %760 = sbr.rel (0) target = $region69
    $region68: #{tpu_custom_call.1} parent=1 // pred_region
      %762 = vsyncadd [#allocation4], 0
      %s763 = sshll.u32 [#allocation10], 4
      %s764 = int_to_ptr.vmem [resolvable:$true] %s763
      %s765 = sshll.u32 %s12, 4
      %s766 = int_to_ptr.hbm [resolvable:$true] %s765
      %771 = dma.vmem_to_hbm [thread:$0]  %s764, 256, %s766, [#allocation4], 128, 128, 8
    $region69: #{tpu_custom_call.1} parent=1 // pred_fallthru
      _
    // Predicated region
    $region70: #{tpu_custom_call.1} parent=1 // pred_check
      _
    $region71: #{tpu_custom_call.1} parent=1 // pred_check_branch
      %773 = sbr.rel (0) target = $region73
    $region72: #{tpu_custom_call.1} parent=1 // pred_region
      %775 = dma.done [#allocation4], 256
    $region73: #{tpu_custom_call.1} parent=1 // pred_fallthru
      _
    %776 = vsyncpa [#allocation3], 1
    %777 = vsyncpa [#allocation6], 1
    %778 = vsyncpa [#allocation9], 1
    %779 = vsyncpa [#allocation4], 1

</llo_original>
